<compile_context>
chip_gen: v5e
topology: v5e:2x2
jax: 0.10.0
libtpu: 0.0.40
codegen_flags: <defaults>
</compile_context>

<pallas_src>
import functools

import jax
import jax.numpy as jnp
from jax.experimental import pallas as pl
from jax.experimental.pallas import tpu as pltpu

_LANES = 128
_SUBLANES = 8
# ~2 MiB of the widest input per grid step: large enough that the ~0.35us
# per-step overhead is negligible even at v7x HBM speeds, small enough that
# 2 inputs x 2 pipeline buffers fit comfortably in every generation's VMEM.
_TARGET_BLOCK_BYTES = 2 * 1024 * 1024
# In-kernel accumulation chunk (rows of 128 lanes): bounds the f32
# temporaries (cast p, cast t, p*t) to ~256 KiB each regardless of block size.
_CHUNK_ROWS = 512


def _pack_rows(dtype):
    """Sublane packing granularity: 8 rows f32, 16 bf16/f16, 32 int8/fp8."""
    itemsize = jnp.dtype(dtype).itemsize
    return max(_SUBLANES, (4 // max(1, itemsize)) * _SUBLANES)


def _num_tensorcores():
    """TensorCores per chip: 2 on v7x-class parts, 1 on v5e/v6e."""
    try:
        kind = jax.devices()[0].device_kind.lower()
    except Exception:
        return 1
    return 2 if ("v7" in kind or "tpu7" in kind) else 1


def _dice_kernel(p_ref, t_ref, o_ref, acc_pt, acc_p, acc_t, *,
                 rows, block_rows, chunk_rows, grid_j, num_blocks, exact):
    c = pl.program_id(0)   # TensorCore split (core-parallel on v7x)
    j = pl.program_id(1)   # sequential sweep over this split's row blocks

    @pl.when(j == 0)
    def _init():
        acc_pt[...] = jnp.zeros_like(acc_pt)
        acc_p[...] = jnp.zeros_like(acc_p)
        acc_t[...] = jnp.zeros_like(acc_t)

    n_chunks = block_rows // chunk_rows

    def _reduce_into(p, t):
        # Pure-VPU fold of a (chunk_rows, 128) f32 tile into the resident
        # (8, 128) accumulators; all cross-lane work is deferred to finalize.
        nr = p.shape[0] // _SUBLANES
        acc_pt[...] += jnp.sum((p * t).reshape(nr, _SUBLANES, _LANES), axis=0)
        acc_p[...] += jnp.sum(p.reshape(nr, _SUBLANES, _LANES), axis=0)
        acc_t[...] += jnp.sum(t.reshape(nr, _SUBLANES, _LANES), axis=0)

    def _accumulate(valid_rows=None):
        # valid_rows: None -> fully valid (no mask); else static row count.
        if n_chunks == 1:
            p = p_ref[...].astype(jnp.float32)
            t = t_ref[...].astype(jnp.float32)
            if valid_rows is not None:
                ridx = jax.lax.broadcasted_iota(jnp.int32, p.shape, 0)
                ok = ridx < valid_rows
                p = jnp.where(ok, p, 0.0)
                t = jnp.where(ok, t, 0.0)
            _reduce_into(p, t)
        else:
            def body(ci, carry):
                base = pl.multiple_of(ci * chunk_rows, chunk_rows)
                p = p_ref[pl.ds(base, chunk_rows), :].astype(jnp.float32)
                t = t_ref[pl.ds(base, chunk_rows), :].astype(jnp.float32)
                if valid_rows is not None:
                    ridx = base + jax.lax.broadcasted_iota(
                        jnp.int32, p.shape, 0)
                    ok = ridx < valid_rows
                    p = jnp.where(ok, p, 0.0)
                    t = jnp.where(ok, t, 0.0)
                _reduce_into(p, t)
                return carry
            jax.lax.fori_loop(0, n_chunks, body, 0, unroll=True)

    if exact:
        # Grid tiles the rows exactly: every block is full, never masked.
        _accumulate()
    else:
        block_idx = c * grid_j + j
        last_block = num_blocks - 1
        tail_rows = rows - last_block * block_rows   # static, in (0, block_rows]

        @pl.when(block_idx < last_block)
        def _full_block():
            _accumulate()                            # unmasked fast path

        @pl.when(block_idx == last_block)
        def _tail_block():
            if tail_rows == block_rows:
                _accumulate()
            else:
                _accumulate(tail_rows)               # mask only the tail block
        # block_idx > last_block: clamped duplicate block -> skip compute.

    @pl.when(j == grid_j - 1)
    def _finalize():
        o_ref[0, 0] = jnp.sum(acc_pt[...])   # sum(p * t) partial
        o_ref[0, 1] = jnp.sum(acc_p[...])    # sum(p)     partial
        o_ref[0, 2] = jnp.sum(acc_t[...])    # sum(t)     partial


def dice_loss(predictions, targets, smooth=1.0):
    """Pallas TPU implementation of DiceLoss.forward (returns a scalar)."""
    assert predictions.shape == targets.shape

    # Keep native dtypes (bf16/int inputs halve/quarter HBM traffic); the f32
    # upcast happens for free on the VPU inside the kernel.
    p = predictions.reshape(-1)
    t = targets.reshape(-1)
    n = p.shape[0]

    p_isz = jnp.dtype(p.dtype).itemsize
    t_isz = jnp.dtype(t.dtype).itemsize

    # Dtype-aware pad granularity so the second-minor block dim always matches
    # native sublane packing (8 rows f32, 16 rows bf16, 32 rows int8/fp8).
    tile_rows = max(_pack_rows(p.dtype), _pack_rows(t.dtype))
    tile = tile_rows * _LANES
    padded = pl.cdiv(n, tile) * tile
    if padded != n:
        # Only taken when n is not already tile-aligned; zero padding does not
        # change any of the three sums.
        # TODO(synk): stream the ragged tail with a manual (pl.ANY +
        # make_async_copy) element-granular mask to avoid this HBM copy for
        # unaligned sizes.
        p = jnp.pad(p, (0, padded - n))
        t = jnp.pad(t, (0, padded - n))

    rows = padded // _LANES                  # multiple of tile_rows
    p2 = p.reshape(rows, _LANES)             # contiguous reshape: no copy
    t2 = t.reshape(rows, _LANES)

    # Block size: ~2 MiB of the widest input per grid step (4096 f32 rows,
    # 8192 bf16 rows), clamped to the array for small inputs.
    target_rows = max(
        tile_rows,
        (_TARGET_BLOCK_BYTES // (_LANES * max(p_isz, t_isz))
         // _CHUNK_ROWS) * _CHUNK_ROWS)
    block_rows = min(target_rows, rows)
    if block_rows > _CHUNK_ROWS and block_rows % _CHUNK_ROWS == 0:
        chunk_rows = _CHUNK_ROWS
    else:
        chunk_rows = block_rows              # small block: single chunk

    num_blocks = pl.cdiv(rows, block_rows)
    # Generation-aware split: 2 on v7x (both TensorCores stream), 1 elsewhere
    # (avoids duplicate clamped blocks / masking on single-TC chips).
    n_split = max(1, min(_num_tensorcores(), num_blocks))
    grid_j = pl.cdiv(num_blocks, n_split)
    last_block = num_blocks - 1

    # Mask-free fast path when the grid tiles the rows exactly.
    exact = (rows % block_rows == 0) and (num_blocks == n_split * grid_j)
    if exact:
        def in_map(c, j):
            return (c * grid_j + j, 0)
    else:
        def in_map(c, j):
            return (jnp.minimum(c * grid_j + j, last_block), 0)

    kernel = functools.partial(
        _dice_kernel,
        rows=rows, block_rows=block_rows, chunk_rows=chunk_rows,
        grid_j=grid_j, num_blocks=num_blocks, exact=exact)

    # VMEM budget: 2 pipeline buffers per input + chunked f32 temporaries.
    vmem_needed = (2 * block_rows * _LANES * (p_isz + t_isz)
                   + 4 * chunk_rows * _LANES * 4
                   + 4 * _SUBLANES * _LANES * 4)
    vmem_limit = int(min(48 << 20, max(32 << 20, int(vmem_needed * 1.5))))

    if n_split > 1:
        dims = (getattr(pltpu, "CORE_PARALLEL", "parallel"), "arbitrary")
    else:
        dims = ("arbitrary", "arbitrary")

    cost = pl.CostEstimate(
        flops=int(3 * rows * _LANES),
        transcendentals=0,
        bytes_accessed=int(rows * _LANES * (p_isz + t_isz) + n_split * 3 * 4))

    partials = pl.pallas_call(
        kernel,
        out_shape=jax.ShapeDtypeStruct((n_split, 3), jnp.float32),
        grid_spec=pltpu.PrefetchScalarGridSpec(
            num_scalar_prefetch=0,
            grid=(n_split, grid_j),
            in_specs=[
                pl.BlockSpec((block_rows, _LANES), in_map),
                pl.BlockSpec((block_rows, _LANES), in_map),
            ],
            out_specs=pl.BlockSpec(
                (1, 3), lambda c, j: (c, 0), memory_space=pltpu.SMEM),
            scratch_shapes=[
                pltpu.VMEM((_SUBLANES, _LANES), jnp.float32),  # sum(p*t)
                pltpu.VMEM((_SUBLANES, _LANES), jnp.float32),  # sum(p)
                pltpu.VMEM((_SUBLANES, _LANES), jnp.float32),  # sum(t)
            ],
        ),
        compiler_params=pltpu.CompilerParams(
            dimension_semantics=dims,
            vmem_limit_bytes=vmem_limit,
        ),
        cost_estimate=cost,
    )(p2, t2)

    # Tiny epilogue in plain JAX: combine per-split partials -> dice -> loss.
    sums = jnp.sum(partials, axis=0)
    inter, sum_p, sum_t = sums[0], sums[1], sums[2]
    dice = (2.0 * inter + smooth) / (sum_p + sum_t + smooth)
    return 1.0 - dice


if __name__ == "__main__":
    key = jax.random.PRNGKey(0)
    kp, kt = jax.random.split(key)

    # small shapes consistent with a segmentation-style use of DiceLoss
    shape = (2, 4, 16, 16)  # [B, C, H, W]
    predictions = jax.nn.sigmoid(jax.random.normal(kp, shape, dtype=jnp.float32))
    targets = (jax.random.uniform(kt, shape) > 0.5).astype(jnp.float32)

    loss = jax.jit(dice_loss)(predictions, targets)
    loss = jax.block_until_ready(loss)

    # reference check in plain JAX
    p = predictions.reshape(-1)
    t = targets.reshape(-1)
    inter = jnp.sum(p * t)
    ref = 1.0 - (2.0 * inter + 1.0) / (jnp.sum(p) + jnp.sum(t) + 1.0)
    assert jnp.allclose(loss, ref, atol=1e-5, rtol=1e-5), (loss, ref)

    print("KERNEL_OK")
</pallas_src>

<mosaic_0001>
module attributes {stable_mosaic.version = 11 : i64} {
  func.func @_dice_kernel(%arg0: i32, %arg1: i32, %arg2: memref<16x128xf32, #tpu.memory_space<vmem>>, %arg3: memref<16x128xf32, #tpu.memory_space<vmem>>, %arg4: memref<1x3xf32, #tpu.memory_space<smem>>, %arg5: memref<8x128xf32, #tpu.memory_space<vmem>>, %arg6: memref<8x128xf32, #tpu.memory_space<vmem>>, %arg7: memref<8x128xf32, #tpu.memory_space<vmem>>) attributes {dimension_semantics = [#tpu.dimension_semantics<arbitrary>, #tpu.dimension_semantics<arbitrary>], iteration_bounds = array<i64: 1, 1>, scalar_prefetch = 0 : i64, scratch_operands = 3 : i64, tpu.core_type = #tpu.core_type<tc>, window_params = [{transform_indices = @transform_0, window_bounds = array<i64: 16, 128>}, {transform_indices = @transform_1, window_bounds = array<i64: 16, 128>}, {transform_indices = @transform_2, window_bounds = array<i64: 1, 3>}]} {
    %c0_i32 = arith.constant 0 : i32
    %0 = arith.cmpi eq, %arg1, %c0_i32 : i32
    %1 = arith.extui %0 : i1 to i32
    %c0_i32_0 = arith.constant 0 : i32
    %2 = arith.cmpi ne, %1, %c0_i32_0 : i32
    scf.if %2 {
      %cst_20 = arith.constant 0.000000e+00 : f32
      %24 = vector.broadcast %cst_20 : f32 to vector<8x128xf32>
      %c0_21 = arith.constant 0 : index
      %c0_22 = arith.constant 0 : index
      %25 = vector.load %arg5[%c0_21, %c0_22] : memref<8x128xf32, #tpu.memory_space<vmem>>, vector<8x128xf32>
      tpu.vector_store %arg5[%c0_21, %c0_22], %24 {strides = array<i32>} : memref<8x128xf32, #tpu.memory_space<vmem>>, vector<8x128xf32>,
      %cst_23 = arith.constant 0.000000e+00 : f32
      %26 = vector.broadcast %cst_23 : f32 to vector<8x128xf32>
      %c0_24 = arith.constant 0 : index
      %c0_25 = arith.constant 0 : index
      %27 = vector.load %arg6[%c0_24, %c0_25] : memref<8x128xf32, #tpu.memory_space<vmem>>, vector<8x128xf32>
      tpu.vector_store %arg6[%c0_24, %c0_25], %26 {strides = array<i32>} : memref<8x128xf32, #tpu.memory_space<vmem>>, vector<8x128xf32>,
      %cst_26 = arith.constant 0.000000e+00 : f32
      %28 = vector.broadcast %cst_26 : f32 to vector<8x128xf32>
      %c0_27 = arith.constant 0 : index
      %c0_28 = arith.constant 0 : index
      %29 = vector.load %arg7[%c0_27, %c0_28] : memref<8x128xf32, #tpu.memory_space<vmem>>, vector<8x128xf32>
      tpu.vector_store %arg7[%c0_27, %c0_28], %28 {strides = array<i32>} : memref<8x128xf32, #tpu.memory_space<vmem>>, vector<8x128xf32>,
    } else {
    }
    %c0 = arith.constant 0 : index
    %c0_1 = arith.constant 0 : index
    %3 = vector.load %arg2[%c0, %c0_1] : memref<16x128xf32, #tpu.memory_space<vmem>>, vector<16x128xf32>
    %c0_2 = arith.constant 0 : index
    %c0_3 = arith.constant 0 : index
    %4 = vector.load %arg3[%c0_2, %c0_3] : memref<16x128xf32, #tpu.memory_space<vmem>>, vector<16x128xf32>
    %c0_4 = arith.constant 0 : index
    %c0_5 = arith.constant 0 : index
    %5 = vector.load %arg5[%c0_4, %c0_5] : memref<8x128xf32, #tpu.memory_space<vmem>>, vector<8x128xf32>
    %6 = arith.mulf %3, %4 : vector<16x128xf32>
    %7 = vector.shape_cast %6 : vector<16x128xf32> to vector<2x8x128xf32>
    %cst = arith.constant dense<0.000000e+00> : vector<8x128xf32>
    %8 = vector.multi_reduction <add>, %7, %cst [0] : vector<2x8x128xf32> to vector<8x128xf32>
    %9 = arith.addf %5, %8 : vector<8x128xf32>
    %c0_6 = arith.constant 0 : index
    %c0_7 = arith.constant 0 : index
    %10 = vector.load %arg5[%c0_6, %c0_7] : memref<8x128xf32, #tpu.memory_space<vmem>>, vector<8x128xf32>
    tpu.vector_store %arg5[%c0_6, %c0_7], %9 {strides = array<i32>} : memref<8x128xf32, #tpu.memory_space<vmem>>, vector<8x128xf32>,
    %c0_8 = arith.constant 0 : index
    %c0_9 = arith.constant 0 : index
    %11 = vector.load %arg6[%c0_8, %c0_9] : memref<8x128xf32, #tpu.memory_space<vmem>>, vector<8x128xf32>
    %12 = vector.shape_cast %3 : vector<16x128xf32> to vector<2x8x128xf32>
    %cst_10 = arith.constant dense<0.000000e+00> : vector<8x128xf32>
    %13 = vector.multi_reduction <add>, %12, %cst_10 [0] : vector<2x8x128xf32> to vector<8x128xf32>
    %14 = arith.addf %11, %13 : vector<8x128xf32>
    %c0_11 = arith.constant 0 : index
    %c0_12 = arith.constant 0 : index
    %15 = vector.load %arg6[%c0_11, %c0_12] : memref<8x128xf32, #tpu.memory_space<vmem>>, vector<8x128xf32>
    tpu.vector_store %arg6[%c0_11, %c0_12], %14 {strides = array<i32>} : memref<8x128xf32, #tpu.memory_space<vmem>>, vector<8x128xf32>,
    %c0_13 = arith.constant 0 : index
    %c0_14 = arith.constant 0 : index
    %16 = vector.load %arg7[%c0_13, %c0_14] : memref<8x128xf32, #tpu.memory_space<vmem>>, vector<8x128xf32>
    %17 = vector.shape_cast %4 : vector<16x128xf32> to vector<2x8x128xf32>
    %cst_15 = arith.constant dense<0.000000e+00> : vector<8x128xf32>
    %18 = vector.multi_reduction <add>, %17, %cst_15 [0] : vector<2x8x128xf32> to vector<8x128xf32>
    %19 = arith.addf %16, %18 : vector<8x128xf32>
    %c0_16 = arith.constant 0 : index
    %c0_17 = arith.constant 0 : index
    %20 = vector.load %arg7[%c0_16, %c0_17] : memref<8x128xf32, #tpu.memory_space<vmem>>, vector<8x128xf32>
    tpu.vector_store %arg7[%c0_16, %c0_17], %19 {strides = array<i32>} : memref<8x128xf32, #tpu.memory_space<vmem>>, vector<8x128xf32>,
    %c0_i32_18 = arith.constant 0 : i32
    %21 = arith.cmpi eq, %arg1, %c0_i32_18 : i32
    %22 = arith.extui %21 : i1 to i32
    %c0_i32_19 = arith.constant 0 : i32
    %23 = arith.cmpi ne, %22, %c0_i32_19 : i32
    scf.if %23 {
      %c0_20 = arith.constant 0 : index
      %c0_21 = arith.constant 0 : index
      %24 = vector.load %arg5[%c0_20, %c0_21] : memref<8x128xf32, #tpu.memory_space<vmem>>, vector<8x128xf32>
      %25 = vector.shape_cast %24 : vector<8x128xf32> to vector<1x8x128xf32>
      %cst_22 = arith.constant dense<0.000000e+00> : vector<1xf32>
      %26 = vector.multi_reduction <add>, %25, %cst_22 [1, 2] : vector<1x8x128xf32> to vector<1xf32>
      %27 = vector.shape_cast %26 : vector<1xf32> to vector<1x1x1xf32>
      %28 = vector.extract %27[0, 0, 0] : f32 from vector<1x1x1xf32>
      %c0_23 = arith.constant 0 : index
      %c0_24 = arith.constant 0 : index
      %29 = memref.load %arg4[%c0_23, %c0_24] : memref<1x3xf32, #tpu.memory_space<smem>>
      memref.store %28, %arg4[%c0_23, %c0_24] : memref<1x3xf32, #tpu.memory_space<smem>>
      %c0_25 = arith.constant 0 : index
      %c0_26 = arith.constant 0 : index
      %30 = vector.load %arg6[%c0_25, %c0_26] : memref<8x128xf32, #tpu.memory_space<vmem>>, vector<8x128xf32>
      %31 = vector.shape_cast %30 : vector<8x128xf32> to vector<1x8x128xf32>
      %cst_27 = arith.constant dense<0.000000e+00> : vector<1xf32>
      %32 = vector.multi_reduction <add>, %31, %cst_27 [1, 2] : vector<1x8x128xf32> to vector<1xf32>
      %33 = vector.shape_cast %32 : vector<1xf32> to vector<1x1x1xf32>
      %34 = vector.extract %33[0, 0, 0] : f32 from vector<1x1x1xf32>
      %c0_28 = arith.constant 0 : index
      %c1 = arith.constant 1 : index
      %35 = memref.load %arg4[%c0_28, %c1] : memref<1x3xf32, #tpu.memory_space<smem>>
      memref.store %34, %arg4[%c0_28, %c1] : memref<1x3xf32, #tpu.memory_space<smem>>
      %c0_29 = arith.constant 0 : index
      %c0_30 = arith.constant 0 : index
      %36 = vector.load %arg7[%c0_29, %c0_30] : memref<8x128xf32, #tpu.memory_space<vmem>>, vector<8x128xf32>
      %37 = vector.shape_cast %36 : vector<8x128xf32> to vector<1x8x128xf32>
      %cst_31 = arith.constant dense<0.000000e+00> : vector<1xf32>
      %38 = vector.multi_reduction <add>, %37, %cst_31 [1, 2] : vector<1x8x128xf32> to vector<1xf32>
      %39 = vector.shape_cast %38 : vector<1xf32> to vector<1x1x1xf32>
      %40 = vector.extract %39[0, 0, 0] : f32 from vector<1x1x1xf32>
      %c0_32 = arith.constant 0 : index
      %c2 = arith.constant 2 : index
      %41 = memref.load %arg4[%c0_32, %c2] : memref<1x3xf32, #tpu.memory_space<smem>>
      memref.store %40, %arg4[%c0_32, %c2] : memref<1x3xf32, #tpu.memory_space<smem>>
    } else {
    }
    return
  }
  func.func @transform_0(%arg0: i32, %arg1: i32) -> (i32, i32) {
    %c1_i32 = arith.constant 1 : i32
    %0 = arith.muli %arg0, %c1_i32 : i32
    %1 = arith.addi %0, %arg1 : i32
    %c0_i32 = arith.constant 0 : i32
    %c0_i32_0 = arith.constant 0 : i32
    return %1, %c0_i32 : i32, i32
  }
  func.func @transform_1(%arg0: i32, %arg1: i32) -> (i32, i32) {
    %c1_i32 = arith.constant 1 : i32
    %0 = arith.muli %arg0, %c1_i32 : i32
    %1 = arith.addi %0, %arg1 : i32
    %c0_i32 = arith.constant 0 : i32
    %c0_i32_0 = arith.constant 0 : i32
    return %1, %c0_i32 : i32, i32
  }
  func.func @transform_2(%arg0: i32, %arg1: i32) -> (i32, i32) {
    %c0_i32 = arith.constant 0 : i32
    %c0_i32_0 = arith.constant 0 : i32
    return %arg0, %c0_i32 : i32, i32
  }
}

</mosaic_0001>

<llo_original>
// kernel: dice_loss.1
$region0: #{dice_loss.1}
  #allocation0 [shape = 'u32[]', space=smem, size = 0x4, offset = 0x4, fixed_abs, tag = 'smem constant byte address 0x4 - core index']
  #allocation1 [shape = 'u32[72,128]{1,0:T(1,128)}', space=vmem, size = 0x9000, scoped, tag = 'internal scratch']
  #allocation2 [shape = 'f32[8,128]{1,0:T(8,128)}', space=vmem, size = 0x1000, scoped, tag = 'scratch operand']
  #allocation3 [shape = 'f32[8,128]{1,0:T(8,128)}', space=vmem, size = 0x1000, scoped, tag = 'scratch operand']
  #allocation4 [shape = 'f32[8,128]{1,0:T(8,128)}', space=vmem, size = 0x1000, scoped, tag = 'scratch operand']
  %s0 = inlined_call_operand.vmem [shape: f32[16,128], index: 0, kind: input, shape index: {}]
  %s1 = inlined_call_operand.vmem [shape: f32[16,128], index: 1, kind: input, shape index: {}]
  %s2 = inlined_call_operand.vmem [shape: f32[1,3], index: 2, kind: output, shape index: {}]
  %s3 = sld [smem:[#allocation0]]
  $region26: #{dice_loss.1} parent=0
    _
  %s5 = ssub.s32 1, %s3
  %s6 = scalar_select 0, %s5, %s3
  $region1: #{dice_loss.1} parent=0
    #allocation5 [shape = 'u8[512]{0}', space=smem, size = 0x200, scoped, tag = 'output window, operand 0, single buffered']
    #allocation6 [shape = 's32[1]{0}', space=sflag, size = 0x4, scoped, tag = 'scoped memory for dice_loss.1']
    %7 = vsyncpa [#allocation6], 0
    // Predicated region
    $region2: #{dice_loss.1} parent=1 // pred_check
      _
    $region3: #{dice_loss.1} parent=1 // pred_check_branch
      %9 = sbr.rel (0) target = $region5
    $region4: #{dice_loss.1} parent=1 // pred_region
      %s10 = sadd.s32 0, 0
      %s11 = smul.u32 2, %s10
      %p12 = scmp.lt.s32.totalorder %s11, 1
      %s13 = scalar_select %p12, %s11, 1
      %s14 = smul.addr %s13, 8
      %s15 = scalar_lea.vmem %s0, %s14
      %s16 = sadd.s32 0, 0
      %s17 = smul.u32 2, %s16
    $region5: #{dice_loss.1} parent=1 // pred_fallthru
      _
    // Predicated region
    $region6: #{dice_loss.1} parent=1 // pred_check
      _
    $region7: #{dice_loss.1} parent=1 // pred_check_branch
      %19 = sbr.rel (0) target = $region9
    $region8: #{dice_loss.1} parent=1 // pred_region
      %s20 = sadd.s32 0, 0
      %s21 = smul.u32 2, %s20
      %p22 = scmp.lt.s32.totalorder %s21, 1
      %s23 = scalar_select %p22, %s21, 1
      %s24 = smul.addr %s23, 8
      %s25 = scalar_lea.vmem %s1, %s24
      %s26 = sadd.s32 0, 0
      %s27 = smul.u32 2, %s26
    $region9: #{dice_loss.1} parent=1 // pred_fallthru
      _
    %s28 = sadd.s32 0, 0
    %s29 = smul.u32 2, %s28
    %p30 = scmp.lt.s32.totalorder %s29, 1
    %s31 = scalar_select %p30, %s29, 1
    %s32 = smul.addr %s31, 8
    %s33 = scalar_lea.vmem %s0, %s32
    %s34 = sadd.s32 0, 0
    %s35 = smul.u32 2, %s34
    %p36 = scmp.lt.s32.totalorder %s35, 1
    %s37 = scalar_select %p36, %s35, 1
    %s38 = smul.addr %s37, 8
    %s39 = scalar_lea.vmem %s1, %s38
    %s40 = sadd.s32 0, 0
    %s41 = smul.u32 2, %s40
    %p42 = scmp.lt.s32.totalorder %s41, 1
    %s43 = scalar_select %p42, %s41, 1
    %s44 = smul.addr %s43, 8
    %s45 = scalar_lea.vmem %s0, %s44
    %s46 = sadd.s32 0, 0
    %s47 = smul.u32 2, %s46
    %s48 = sadd.s32 0, 0
    %s49 = smul.u32 2, %s48
    %p50 = scmp.lt.s32.totalorder %s49, 1
    %s51 = scalar_select %p50, %s49, 1
    %s52 = smul.addr %s51, 8
    %s53 = scalar_lea.vmem %s1, %s52
    %s54 = sadd.s32 0, 0
    %s55 = smul.u32 2, %s54
    %p56 = scmp.eq.s32.totalorder 0, 0
    // Predicated region
    $region10: #{dice_loss.1} parent=1 // pred_check
      %p57 = pneg %p56
    $region11: #{dice_loss.1} parent=1 // pred_check_branch
      %59 = sbr.rel (%p57) target = $region13
    $region12: #{dice_loss.1} parent=1 // pred_region
      %60 = vst [vmem:[#allocation2] sm:$0xff] 0.0
      %61 = vst [vmem:[#allocation3] sm:$0xff] 0.0
      %62 = vst [vmem:[#allocation4] sm:$0xff] 0.0
    $region13: #{dice_loss.1} parent=1 // pred_fallthru
      _
    %v63 = vld [vmem:[%s45] sm:$0xff]
    %v64 = vld [vmem:[%s45 + $0x8] sm:$0xff]
    %v65 = vld [vmem:[%s53] sm:$0xff]
    %v66 = vld [vmem:[%s53 + $0x8] sm:$0xff]
    %v67 = vld [vmem:[#allocation2] sm:$0xff]
    %v68 = vmul.f32 %v63, %v65
    %v69 = vmul.f32 %v64, %v66
    %v70 = vadd.f32 %v68, %v69
    %v71 = vadd.f32 %v67, %v70
    %72 = vst [vmem:[#allocation2] sm:$0xff] %v71
    %v73 = vld [vmem:[#allocation3] sm:$0xff]
    %v74 = vadd.f32 %v63, %v64
    %v75 = vadd.f32 %v73, %v74
    %76 = vst [vmem:[#allocation3] sm:$0xff] %v75
    %v77 = vld [vmem:[#allocation4] sm:$0xff]
    %v78 = vadd.f32 %v65, %v66
    %v79 = vadd.f32 %v77, %v78
    %80 = vst [vmem:[#allocation4] sm:$0xff] %v79
    // Predicated region
    $region14: #{dice_loss.1} parent=1 // pred_check
      %p81 = pneg %p56
    $region15: #{dice_loss.1} parent=1 // pred_check_branch
      %83 = sbr.rel (%p81) target = $region17
    $region16: #{dice_loss.1} parent=1 // pred_region
      %v84 = vld [vmem:[#allocation2] sm:$0xff]
      %85 = vadd.xlane.f32.xlu0 %v84
      %v86 = vpop.xlane.xlu0 %85
      %v87 = vrot.slane %v86, 4
      %v88 = vadd.f32 %v86, %v87
      %v89 = vrot.slane %v88, 2
      %v90 = vadd.f32 %v88, %v89
      %v91 = vrot.slane %v90, 1
      %v92 = vadd.f32 %v90, %v91
      %s93 = vtos %v92
      %s94 = scalar_lea.smem [#allocation5], 0
      %95 = sst [smem:[%s94]] %s93
      %v96 = vld [vmem:[#allocation3] sm:$0xff]
      %97 = vadd.xlane.f32.xlu0 %v96
      %v98 = vpop.xlane.xlu0 %97
      %v99 = vrot.slane %v98, 4
      %v100 = vadd.f32 %v98, %v99
      %v101 = vrot.slane %v100, 2
      %v102 = vadd.f32 %v100, %v101
      %v103 = vrot.slane %v102, 1
      %v104 = vadd.f32 %v102, %v103
      %s105 = vtos %v104
      %s106 = scalar_lea.smem [#allocation5], 1
      %107 = sst [smem:[%s106]] %s105
      %v108 = vld [vmem:[#allocation4] sm:$0xff]
      %109 = vadd.xlane.f32.xlu0 %v108
      %v110 = vpop.xlane.xlu0 %109
      %v111 = vrot.slane %v110, 4
      %v112 = vadd.f32 %v110, %v111
      %v113 = vrot.slane %v112, 2
      %v114 = vadd.f32 %v112, %v113
      %v115 = vrot.slane %v114, 1
      %v116 = vadd.f32 %v114, %v115
      %s117 = vtos %v116
      %s118 = scalar_lea.smem [#allocation5], 2
      %119 = sst [smem:[%s118]] %s117
    $region17: #{dice_loss.1} parent=1 // pred_fallthru
      _
    // Predicated region
    $region18: #{dice_loss.1} parent=1 // pred_check
      _
    $region19: #{dice_loss.1} parent=1 // pred_check_branch
      %121 = sbr.rel (0) target = $region21
    $region20: #{dice_loss.1} parent=1 // pred_region
      %123 = vsyncadd [#allocation6], 0
      %s125 = sshll.u32 %s2, 4
      %s126 = int_to_ptr.vmem [resolvable:$true] %s125
      %128 = dma.smem_to_vmem [#allocation5], 16, %s126, [#allocation6]
    $region21: #{dice_loss.1} parent=1 // pred_fallthru
      _
    // Predicated region
    $region22: #{dice_loss.1} parent=1 // pred_check
      _
    $region23: #{dice_loss.1} parent=1 // pred_check_branch
      %130 = sbr.rel (0) target = $region25
    $region24: #{dice_loss.1} parent=1 // pred_region
      %132 = dma.done [#allocation6], 16
    $region25: #{dice_loss.1} parent=1 // pred_fallthru
      _
    %133 = sfence
    %134 = vsyncpa [#allocation6], 1

</llo_original>
